<compile_context>
chip_gen: v7x
topology: tpu7x:2x2x1
jax: 0.10.0
libtpu: 0.0.40
codegen_flags: <defaults>
</compile_context>

<pallas_src>
import functools

import jax
import jax.numpy as jnp
from jax.experimental import pallas as pl
from jax.experimental.pallas import tpu as pltpu


def _mean_loss_kernel(x_ref, y_ref, o_ref, *, kh, kw):
    # x_ref / y_ref: (1, 3, Hp, Wp) VMEM block = one depth-group of one batch.
    # o_ref: (1, 1, 1, 128) VMEM block; per-(b, g) partial sum broadcast over lanes.
    _, _, Hp, Wp = x_ref.shape
    Hout = Hp - kh + 1          # spatial stride 1, VALID
    Wout = Wp - kw + 1
    inv = 1.0 / float(3 * kh * kw)

    # |pool(x) - pool(y)| == |pool(x - y)| (linearity): one channel-summed diff.
    d = ((x_ref[0, 0].astype(jnp.float32) - y_ref[0, 0].astype(jnp.float32))
         + (x_ref[0, 1].astype(jnp.float32) - y_ref[0, 1].astype(jnp.float32))
         + (x_ref[0, 2].astype(jnp.float32) - y_ref[0, 2].astype(jnp.float32)))

    # Separable sliding-window sum: rows (sublane shifts) then cols (lane shifts).
    r = d[0:Hout, :]
    for di in range(1, kh):
        r = r + d[di:di + Hout, :]
    c = r[:, 0:Wout]
    for dj in range(1, kw):
        c = c + r[:, dj:dj + Wout]

    part = jnp.sum(jnp.abs(c)) * inv            # scale applied once, not per element
    o_ref[...] = jnp.broadcast_to(part, o_ref.shape)


def _pad_amounts(h, w, kernel):
    # Exactly the PyTorch _mean_pad formula: k - (dim % k)  (== k when divisible)
    kh, kw = kernel
    pad_b = kh - (h - h // kh * kh) % kh
    pad_r = kw - (w - w // kw * kw) % kw
    return pad_b, pad_r


def _reflect_pad(a, kernel):
    pad_b, pad_r = _pad_amounts(a.shape[-2], a.shape[-1], kernel)
    # reflect padding requires pad <= dim - 1 (same restriction as PyTorch).
    assert pad_b <= a.shape[-2] - 1 and pad_r <= a.shape[-1] - 1, (
        "reflect pad larger than spatial dim - 1; input too small for kernel")
    return jnp.pad(a, ((0, 0), (0, 0), (0, pad_b), (0, pad_r)), mode="reflect")


def _mean_diff_pallas(xp, yp, kh, kw):
    B, C, Hp, Wp = xp.shape
    assert C >= 3, "AvgPool3d depth kernel 3 needs at least 3 channels"
    D = (C - 3) // 3 + 1   # depth groups; trailing channels dropped (VALID)

    block_bytes = 3 * Hp * Wp * jnp.dtype(xp.dtype).itemsize
    # 2 inputs x 2 pipeline buffers + headroom; floor = default scoped limit,
    # cap = v7x physical VMEM.
    vmem_limit = int(min(64 << 20, max(4 * block_bytes + (8 << 20), 32 << 20)))

    out = pl.pallas_call(
        functools.partial(_mean_loss_kernel, kh=kh, kw=kw),
        out_shape=jax.ShapeDtypeStruct((B, D, 1, 128), jnp.float32),
        grid=(B, D),
        in_specs=[
            pl.BlockSpec((1, 3, Hp, Wp), lambda b, g: (b, g, 0, 0)),
            pl.BlockSpec((1, 3, Hp, Wp), lambda b, g: (b, g, 0, 0)),
        ],
        out_specs=pl.BlockSpec((1, 1, 1, 128), lambda b, g: (b, g, 0, 0)),
        compiler_params=pltpu.CompilerParams(
            dimension_semantics=("parallel", "parallel"),
            vmem_limit_bytes=vmem_limit,
        ),
    )(xp, yp)
    # (B, D) partial sums -> per-batch loss (tiny reduction, plain JAX).
    return out[:, :, 0, 0].sum(axis=1, keepdims=True)


@functools.partial(jax.jit, static_argnames=("kernels",))
def mean_loss(x, y, kernels=((5, 5),)):
    B = x.shape[0]
    x = x.reshape(B, -1, x.shape[-2], x.shape[-1])
    y = y.reshape(B, -1, y.shape[-2], y.shape[-1])
    # TODO(synk): fuse multiple kernel sizes into one pallas_call (pad once to
    # the max kernel, slice per size) to avoid re-reading x/y per kernel size.
    parts = []
    for (kh, kw) in kernels:
        xp = _reflect_pad(x, (kh, kw))
        yp = _reflect_pad(y, (kh, kw))
        parts.append(_mean_diff_pallas(xp, yp, kh, kw))
    return jnp.concatenate(parts, axis=-1).sum(axis=-1, keepdims=True)


def _mean_loss_ref(x, y, kernels=((5, 5),)):
    # Pure-JAX reference (AvgPool3d via reduce_window), faithful to PyTorch:
    # pools x and y separately, then abs-diff and per-batch sum.
    B = x.shape[0]
    x = x.reshape(B, -1, x.shape[-2], x.shape[-1]).astype(jnp.float32)
    y = y.reshape(B, -1, y.shape[-2], y.shape[-1]).astype(jnp.float32)
    parts = []
    for (kh, kw) in kernels:
        xp = _reflect_pad(x, (kh, kw))
        yp = _reflect_pad(y, (kh, kw))

        def pool(a):
            s = jax.lax.reduce_window(
                a, 0.0, jax.lax.add, (1, 3, kh, kw), (1, 3, 1, 1), "VALID")
            return s / float(3 * kh * kw)

        d = jnp.abs(pool(xp) - pool(yp)).reshape(B, -1).sum(-1, keepdims=True)
        parts.append(d)
    return jnp.concatenate(parts, -1).sum(-1, keepdims=True)


if __name__ == "__main__":
    # NCHW, C a multiple of 3 so the depth-3/stride-3 pooling covers all channels.
    B, C, H, W = 2, 6, 16, 16
    key = jax.random.PRNGKey(0)
    kx, ky = jax.random.split(key)
    x = jax.random.normal(kx, (B, C, H, W), dtype=jnp.float32)
    y = jax.random.normal(ky, (B, C, H, W), dtype=jnp.float32)

    out = jax.block_until_ready(mean_loss(x, y, kernels=((5, 5),)))
    ref = jax.block_until_ready(_mean_loss_ref(x, y, kernels=((5, 5),)))

    assert out.shape == (B, 1), out.shape
    assert jnp.allclose(out, ref, rtol=1e-5, atol=1e-4), (out, ref)

    print("KERNEL_OK")
</pallas_src>

<mosaic_0001>
module attributes {stable_mosaic.version = 11 : i64} {
  func.func @_mean_loss_kernel(%arg0: i32, %arg1: i32, %arg2: memref<1x3x20x20xf32, #tpu.memory_space<vmem>>, %arg3: memref<1x3x20x20xf32, #tpu.memory_space<vmem>>, %arg4: memref<1x1x1x128xf32, #tpu.memory_space<vmem>>) attributes {dimension_semantics = [#tpu.dimension_semantics<parallel>, #tpu.dimension_semantics<parallel>], iteration_bounds = array<i64: 2, 2>, scalar_prefetch = 0 : i64, scratch_operands = 0 : i64, tpu.core_type = #tpu.core_type<tc>, window_params = [{transform_indices = @transform_0, window_bounds = array<i64: 1, 3, 20, 20>}, {transform_indices = @transform_1, window_bounds = array<i64: 1, 3, 20, 20>}, {transform_indices = @transform_2, window_bounds = array<i64: 1, 1, 1, 128>}]} {
    %c0 = arith.constant 0 : index
    %c0_0 = arith.constant 0 : index
    %c0_1 = arith.constant 0 : index
    %c0_2 = arith.constant 0 : index
    %0 = vector.load %arg2[%c0, %c0_0, %c0_1, %c0_2] : memref<1x3x20x20xf32, #tpu.memory_space<vmem>>, vector<1x1x20x20xf32>
    %1 = vector.shape_cast %0 : vector<1x1x20x20xf32> to vector<20x20xf32>
    %c0_3 = arith.constant 0 : index
    %c0_4 = arith.constant 0 : index
    %c0_5 = arith.constant 0 : index
    %c0_6 = arith.constant 0 : index
    %2 = vector.load %arg3[%c0_3, %c0_4, %c0_5, %c0_6] : memref<1x3x20x20xf32, #tpu.memory_space<vmem>>, vector<1x1x20x20xf32>
    %3 = vector.shape_cast %2 : vector<1x1x20x20xf32> to vector<20x20xf32>
    %4 = arith.subf %1, %3 : vector<20x20xf32>
    %c0_7 = arith.constant 0 : index
    %c1 = arith.constant 1 : index
    %c0_8 = arith.constant 0 : index
    %c0_9 = arith.constant 0 : index
    %5 = vector.load %arg2[%c0_7, %c1, %c0_8, %c0_9] : memref<1x3x20x20xf32, #tpu.memory_space<vmem>>, vector<1x1x20x20xf32>
    %6 = vector.shape_cast %5 : vector<1x1x20x20xf32> to vector<20x20xf32>
    %c0_10 = arith.constant 0 : index
    %c1_11 = arith.constant 1 : index
    %c0_12 = arith.constant 0 : index
    %c0_13 = arith.constant 0 : index
    %7 = vector.load %arg3[%c0_10, %c1_11, %c0_12, %c0_13] : memref<1x3x20x20xf32, #tpu.memory_space<vmem>>, vector<1x1x20x20xf32>
    %8 = vector.shape_cast %7 : vector<1x1x20x20xf32> to vector<20x20xf32>
    %9 = arith.subf %6, %8 : vector<20x20xf32>
    %10 = arith.addf %4, %9 : vector<20x20xf32>
    %c0_14 = arith.constant 0 : index
    %c2 = arith.constant 2 : index
    %c0_15 = arith.constant 0 : index
    %c0_16 = arith.constant 0 : index
    %11 = vector.load %arg2[%c0_14, %c2, %c0_15, %c0_16] : memref<1x3x20x20xf32, #tpu.memory_space<vmem>>, vector<1x1x20x20xf32>
    %12 = vector.shape_cast %11 : vector<1x1x20x20xf32> to vector<20x20xf32>
    %c0_17 = arith.constant 0 : index
    %c2_18 = arith.constant 2 : index
    %c0_19 = arith.constant 0 : index
    %c0_20 = arith.constant 0 : index
    %13 = vector.load %arg3[%c0_17, %c2_18, %c0_19, %c0_20] : memref<1x3x20x20xf32, #tpu.memory_space<vmem>>, vector<1x1x20x20xf32>
    %14 = vector.shape_cast %13 : vector<1x1x20x20xf32> to vector<20x20xf32>
    %15 = arith.subf %12, %14 : vector<20x20xf32>
    %16 = arith.addf %10, %15 : vector<20x20xf32>
    %17 = vector.extract_strided_slice %16 {offsets = [0, 0], sizes = [16, 20], strides = [1, 1]} : vector<20x20xf32> to vector<16x20xf32>
    %18 = vector.extract_strided_slice %16 {offsets = [1, 0], sizes = [16, 20], strides = [1, 1]} : vector<20x20xf32> to vector<16x20xf32>
    %19 = arith.addf %17, %18 : vector<16x20xf32>
    %20 = vector.extract_strided_slice %16 {offsets = [2, 0], sizes = [16, 20], strides = [1, 1]} : vector<20x20xf32> to vector<16x20xf32>
    %21 = arith.addf %19, %20 : vector<16x20xf32>
    %22 = vector.extract_strided_slice %16 {offsets = [3, 0], sizes = [16, 20], strides = [1, 1]} : vector<20x20xf32> to vector<16x20xf32>
    %23 = arith.addf %21, %22 : vector<16x20xf32>
    %24 = vector.extract_strided_slice %16 {offsets = [4, 0], sizes = [16, 20], strides = [1, 1]} : vector<20x20xf32> to vector<16x20xf32>
    %25 = arith.addf %23, %24 : vector<16x20xf32>
    %26 = vector.extract_strided_slice %25 {offsets = [0, 0], sizes = [16, 16], strides = [1, 1]} : vector<16x20xf32> to vector<16x16xf32>
    %27 = vector.extract_strided_slice %25 {offsets = [0, 1], sizes = [16, 16], strides = [1, 1]} : vector<16x20xf32> to vector<16x16xf32>
    %28 = arith.addf %26, %27 : vector<16x16xf32>
    %29 = vector.extract_strided_slice %25 {offsets = [0, 2], sizes = [16, 16], strides = [1, 1]} : vector<16x20xf32> to vector<16x16xf32>
    %30 = arith.addf %28, %29 : vector<16x16xf32>
    %31 = vector.extract_strided_slice %25 {offsets = [0, 3], sizes = [16, 16], strides = [1, 1]} : vector<16x20xf32> to vector<16x16xf32>
    %32 = arith.addf %30, %31 : vector<16x16xf32>
    %33 = vector.extract_strided_slice %25 {offsets = [0, 4], sizes = [16, 16], strides = [1, 1]} : vector<16x20xf32> to vector<16x16xf32>
    %34 = arith.addf %32, %33 : vector<16x16xf32>
    %35 = math.absf %34 : vector<16x16xf32>
    %36 = vector.shape_cast %35 : vector<16x16xf32> to vector<1x16x16xf32>
    %cst = arith.constant dense<0.000000e+00> : vector<1xf32>
    %37 = vector.multi_reduction <add>, %36, %cst [1, 2] : vector<1x16x16xf32> to vector<1xf32>
    %38 = vector.shape_cast %37 : vector<1xf32> to vector<1x1x1xf32>
    %39 = vector.extract %38[0, 0, 0] : f32 from vector<1x1x1xf32>
    %cst_21 = arith.constant 0.0133333337 : f32
    %40 = arith.mulf %39, %cst_21 : f32
    %41 = vector.broadcast %40 : f32 to vector<1x1x1x128xf32>
    %c0_22 = arith.constant 0 : index
    %c0_23 = arith.constant 0 : index
    %c0_24 = arith.constant 0 : index
    %c0_25 = arith.constant 0 : index
    %42 = vector.load %arg4[%c0_22, %c0_23, %c0_24, %c0_25] : memref<1x1x1x128xf32, #tpu.memory_space<vmem>>, vector<1x1x1x128xf32>
    tpu.vector_store %arg4[%c0_22, %c0_23, %c0_24, %c0_25], %41 {strides = array<i32>} : memref<1x1x1x128xf32, #tpu.memory_space<vmem>>, vector<1x1x1x128xf32>,
    return
  }
  func.func @transform_0(%arg0: i32, %arg1: i32) -> (i32, i32, i32, i32) {
    %c0_i32 = arith.constant 0 : i32
    %c0_i32_0 = arith.constant 0 : i32
    %c0_i32_1 = arith.constant 0 : i32
    return %arg0, %arg1, %c0_i32, %c0_i32_0 : i32, i32, i32, i32
  }
  func.func @transform_1(%arg0: i32, %arg1: i32) -> (i32, i32, i32, i32) {
    %c0_i32 = arith.constant 0 : i32
    %c0_i32_0 = arith.constant 0 : i32
    %c0_i32_1 = arith.constant 0 : i32
    return %arg0, %arg1, %c0_i32, %c0_i32_0 : i32, i32, i32, i32
  }
  func.func @transform_2(%arg0: i32, %arg1: i32) -> (i32, i32, i32, i32) {
    %c0_i32 = arith.constant 0 : i32
    %c0_i32_0 = arith.constant 0 : i32
    %c0_i32_1 = arith.constant 0 : i32
    return %arg0, %arg1, %c0_i32, %c0_i32_0 : i32, i32, i32, i32
  }
}

</mosaic_0001>

<llo_original>
// kernel: mean_loss.1
$region0: #{mean_loss.1}
  #allocation0 [shape = 'u32[]', space=smem, size = 0x4, offset = 0x4, fixed_abs, tag = 'smem constant byte address 0x4 - core index']
  #allocation1 [shape = 'u32[144,128]{1,0:T(1,128)}', space=vmem, size = 0x12000, scoped, tag = 'internal scratch']
  %s0 = inlined_call_operand.vmem [shape: f32[2,6,20,20], index: 0, kind: input, shape index: {}]
  %s1 = inlined_call_operand.vmem [shape: f32[2,6,20,20], index: 1, kind: input, shape index: {}]
  %s2 = inlined_call_operand.vmem [shape: f32[2,2,1,128], index: 2, kind: output, shape index: {}]
  %s3 = sld [smem:[#allocation0]]
  $region41: #{mean_loss.1} parent=0
    _
  %s5 = ssub.s32 1, %s3
  %s6 = scalar_select 0, %s5, %s3
  loop: start=0, step=1, limit=6
  $region2: #{mean_loss.1} parent=0 // loop_pre_header
    _
  $region3: #{mean_loss.1} parent=0 // loop_header
    %s8 = sphi 0, %s12
    %p9 = scmp.ge.s32.totalorder %s8, 6
    %s15 = sphi 0, %s27
    %s16 = sphi 0, %s23
    %s17 = sphi 0, %s15
    %s18 = sphi 0, %s16
    %s19 = sphi 0, %s17
    %s20 = sphi 0, %s18
    %s32 = sphi 0, %s34
    %s35 = sphi 0, %s32
    %s36 = sphi 0, %s35
    %s52 = sphi 0, %s36
    %s60 = sphi 0, %s62
    %s63 = sphi 0, %s60
    %s64 = sphi 0, %s63
    %s80 = sphi 0, %s64
    %s88 = sphi 0, %s90
    %s91 = sphi 0, %s88
    %s92 = sphi 0, %s91
    %s108 = sphi 0, %s92
  $region4: #{mean_loss.1} parent=0 // loop_header_branch
    %11 = sbr.rel (%p9) target = $region8
  $region5: #{mean_loss.1} parent=0 // loop_body
    %s13 = ssub.s32 %s8, 1
    %s14 = ssub.s32 %s8, 2
    %s21 = sadd.s32 1, %s16
    %p22 = scmp.ge.s32.totalorder %s21, 2
    %s23 = scalar_select %p22, 0, %s21
    %s24 = sadd.s32 1, %s15
    %s25 = scalar_select %p22, %s24, %s15
    %p26 = scmp.ge.s32.totalorder %s25, 2
    %s27 = scalar_select %p26, 0, %s25
    %s28 = ssub.s32 %s15, %s27
    %s29 = ssub.s32 %s16, %s23
    %s30 = sor.u32 %s28, %s29
    %p31 = scmp.eq.s32.totalorder %s30, 0
    %s33 = sadd.s32 %s32, 1
    %s34 = scalar_select %p31, %s32, %s33
    %p37 = pneg %p31
    %p38 = scmp.eq.s32.totalorder %s8, 3
    %p39 = por %p37, %p38
    %p40 = scmp.ne.s32.totalorder %s32, %s35
    %p41 = scmp.eq.s32.totalorder %s8, 0
    %p42 = por %p40, %p41
    %p43 = scmp.ne.s32.totalorder %s32, %s35
    %p44 = scmp.eq.s32.totalorder %s13, 3
    %p45 = por %p43, %p44
    %p46 = scmp.ne.s32.totalorder %s35, %s36
    %p47 = scmp.eq.s32.totalorder %s13, 0
    %p48 = por %p46, %p47
    %p49 = scmp.ne.s32.totalorder %s35, %s36
    %p50 = scmp.eq.s32.totalorder %s14, 3
    %p51 = por %p49, %p50
    %p53 = scmp.ne.s32.totalorder %s36, %s52
    %p54 = scmp.eq.s32.totalorder %s14, 0
    %p55 = por %p53, %p54
    %s56 = ssub.s32 %s15, %s27
    %s57 = ssub.s32 %s16, %s23
    %s58 = sor.u32 %s56, %s57
    %p59 = scmp.eq.s32.totalorder %s58, 0
    %s61 = sadd.s32 %s60, 1
    %s62 = scalar_select %p59, %s60, %s61
    %p65 = pneg %p59
    %p66 = scmp.eq.s32.totalorder %s8, 3
    %p67 = por %p65, %p66
    %p68 = scmp.ne.s32.totalorder %s60, %s63
    %p69 = scmp.eq.s32.totalorder %s8, 0
    %p70 = por %p68, %p69
    %p71 = scmp.ne.s32.totalorder %s60, %s63
    %p72 = scmp.eq.s32.totalorder %s13, 3
    %p73 = por %p71, %p72
    %p74 = scmp.ne.s32.totalorder %s63, %s64
    %p75 = scmp.eq.s32.totalorder %s13, 0
    %p76 = por %p74, %p75
    %p77 = scmp.ne.s32.totalorder %s63, %s64
    %p78 = scmp.eq.s32.totalorder %s14, 3
    %p79 = por %p77, %p78
    %p81 = scmp.ne.s32.totalorder %s64, %s80
    %p82 = scmp.eq.s32.totalorder %s14, 0
    %p83 = por %p81, %p82
    %s84 = ssub.s32 %s15, %s27
    %s85 = ssub.s32 %s16, %s23
    %s86 = sor.u32 %s84, %s85
    %p87 = scmp.eq.s32.totalorder %s86, 0
    %s89 = sadd.s32 %s88, 1
    %s90 = scalar_select %p87, %s88, %s89
    %p93 = pneg %p87
    %p94 = scmp.eq.s32.totalorder %s8, 3
    %p95 = por %p93, %p94
    %p96 = scmp.ne.s32.totalorder %s88, %s91
    %p97 = scmp.eq.s32.totalorder %s8, 0
    %p98 = por %p96, %p97
    %p99 = scmp.ne.s32.totalorder %s88, %s91
    %p100 = scmp.eq.s32.totalorder %s13, 3
    %p101 = por %p99, %p100
    %p102 = scmp.ne.s32.totalorder %s91, %s92
    %p103 = scmp.eq.s32.totalorder %s13, 0
    %p104 = por %p102, %p103
    %p105 = scmp.ne.s32.totalorder %s91, %s92
    %p106 = scmp.eq.s32.totalorder %s14, 3
    %p107 = por %p105, %p106
    %p109 = scmp.ne.s32.totalorder %s92, %s108
    %p110 = scmp.eq.s32.totalorder %s14, 0
    %p111 = por %p109, %p110
    %p112 = scmp.le.s32.totalorder 1, %s8
    %p113 = scmp.lt.s32.totalorder %s8, 5
    %p114 = pnand %p112, %p113
    %p115 = pneg %p114
    // Predicated region
    $region9: #{mean_loss.1} parent=5 // pred_check
      _
    $region10: #{mean_loss.1} parent=5 // pred_check_branch
      %117 = sbr.rel (%p114) target = $region12
    $region11: #{mean_loss.1} parent=5 // pred_region
      %s118 = ssub.s32 %s8, 1
    $region12: #{mean_loss.1} parent=5 // pred_fallthru
      _
    %p119 = scmp.lt.s32.totalorder %s8, 4
    // Predicated region
    $region13: #{mean_loss.1} parent=5 // pred_check
      %p120 = pneg %p119
    $region14: #{mean_loss.1} parent=5 // pred_check_branch
      %122 = sbr.rel (%p120) target = $region16
    $region15: #{mean_loss.1} parent=5 // pred_region
      // Predicated region
      $region17: #{mean_loss.1} parent=15 // pred_check
        %p123 = pneg %p42
      $region18: #{mean_loss.1} parent=15 // pred_check_branch
        %125 = sbr.rel (%p123) target = $region20
      $region19: #{mean_loss.1} parent=15 // pred_region
        %s126 = smul.u32 3, %s16
        %p127 = scmp.lt.s32.totalorder %s15, 1
        %s128 = scalar_select %p127, %s15, 1
        %p129 = scmp.lt.s32.totalorder %s126, 5
        %s130 = scalar_select %p129, %s126, 5
        %s131 = smul.addr %s130, 3
        %s132 = smul.addr %s128, 18
        %s133 = sadd.s32 %s131, %s132
        %s134 = smul.addr %s133, 8
        %s135 = scalar_lea.vmem %s0, %s134
        %s136 = smul.u32 3, %s16
      $region20: #{mean_loss.1} parent=15 // pred_fallthru
        _
      // Predicated region
      $region21: #{mean_loss.1} parent=15 // pred_check
        %p137 = pneg %p70
      $region22: #{mean_loss.1} parent=15 // pred_check_branch
        %139 = sbr.rel (%p137) target = $region24
      $region23: #{mean_loss.1} parent=15 // pred_region
        %s140 = smul.u32 3, %s16
        %p141 = scmp.lt.s32.totalorder %s15, 1
        %s142 = scalar_select %p141, %s15, 1
        %p143 = scmp.lt.s32.totalorder %s140, 5
        %s144 = scalar_select %p143, %s140, 5
        %s145 = smul.addr %s144, 3
        %s146 = smul.addr %s142, 18
        %s147 = sadd.s32 %s145, %s146
        %s148 = smul.addr %s147, 8
        %s149 = scalar_lea.vmem %s1, %s148
        %s150 = smul.u32 3, %s16
      $region24: #{mean_loss.1} parent=15 // pred_fallthru
        _
    $region16: #{mean_loss.1} parent=5 // pred_fallthru
      _
    %p151 = scmp.le.s32.totalorder 1, %s8
    %p152 = scmp.lt.s32.totalorder %s8, 5
    %p153 = pnand %p151, %p152
    %p154 = pneg %p153
    // Predicated region
    $region25: #{mean_loss.1} parent=5 // pred_check
      _
    $region26: #{mean_loss.1} parent=5 // pred_check_branch
      %156 = sbr.rel (%p153) target = $region28
    $region27: #{mean_loss.1} parent=5 // pred_region
      %s157 = ssub.s32 %s8, 1
      %s158 = smul.u32 3, %s18
      %p159 = scmp.lt.s32.totalorder %s17, 1
      %s160 = scalar_select %p159, %s17, 1
      %p161 = scmp.lt.s32.totalorder %s158, 5
      %s162 = scalar_select %p161, %s158, 5
      %s163 = smul.addr %s162, 3
      %s164 = smul.addr %s160, 18
      %s165 = sadd.s32 %s163, %s164
      %s166 = smul.addr %s165, 8
      %s167 = scalar_lea.vmem %s0, %s166
      %p168 = pneg %p48
      %p169 = pneg %p45
      %s170 = smul.u32 3, %s18
      %p171 = scmp.lt.s32.totalorder %s17, 1
      %s172 = scalar_select %p171, %s17, 1
      %p173 = scmp.lt.s32.totalorder %s170, 5
      %s174 = scalar_select %p173, %s170, 5
      %s175 = smul.addr %s174, 3
      %s176 = smul.addr %s172, 18
      %s177 = sadd.s32 %s175, %s176
      %s178 = smul.addr %s177, 8
      %s179 = scalar_lea.vmem %s1, %s178
      %p180 = pneg %p76
      %p181 = pneg %p73
      %p182 = pneg %p104
      %p183 = pneg %p101
      %p184 = scmp.lt.s32.totalorder %s17, 1
      %s185 = scalar_select %p184, %s17, 1
      %p186 = scmp.lt.s32.totalorder %s18, 1
      %s187 = scalar_select %p186, %s18, 1
      %s188 = smul.addr %s185, 2
      %s189 = sadd.s32 %s187, %s188
      %s190 = scalar_lea.vmem %s2, %s189
      %s191 = smul.u32 3, %s18
      %p192 = scmp.lt.s32.totalorder %s17, 1
      %s193 = scalar_select %p192, %s17, 1
      %p194 = scmp.lt.s32.totalorder %s191, 5
      %s195 = scalar_select %p194, %s191, 5
      %s196 = smul.addr %s195, 3
      %s197 = smul.addr %s193, 18
      %s198 = sadd.s32 %s196, %s197
      %s199 = smul.addr %s198, 8
      %s200 = scalar_lea.vmem %s0, %s199
      %s201 = smul.u32 3, %s18
      %s202 = smul.u32 3, %s18
      %p203 = scmp.lt.s32.totalorder %s17, 1
      %s204 = scalar_select %p203, %s17, 1
      %p205 = scmp.lt.s32.totalorder %s202, 5
      %s206 = scalar_select %p205, %s202, 5
      %s207 = smul.addr %s206, 3
      %s208 = smul.addr %s204, 18
      %s209 = sadd.s32 %s207, %s208
      %s210 = smul.addr %s209, 8
      %s211 = scalar_lea.vmem %s1, %s210
      %s212 = smul.u32 3, %s18
      %p213 = scmp.lt.s32.totalorder %s17, 1
      %s214 = scalar_select %p213, %s17, 1
      %p215 = scmp.lt.s32.totalorder %s18, 1
      %s216 = scalar_select %p215, %s18, 1
      %s217 = smul.addr %s214, 2
      %s218 = sadd.s32 %s216, %s217
      %s219 = scalar_lea.vmem %s2, %s218
      %v220 = vld [vmem:[%s200] sm:$0xff]
      %v221 = vld [vmem:[%s200 + $0x8] sm:$0xff]
      %v222 = vld [vmem:[%s200 + $0x10] sm:$0xf]
      %v223 = vld [vmem:[%s211] sm:$0xff]
      %v224 = vld [vmem:[%s211 + $0x8] sm:$0xff]
      %v225 = vld [vmem:[%s211 + $0x10] sm:$0xf]
      %v226 = vsub.f32 %v220, %v223
      %v227 = vsub.f32 %v221, %v224
      %v228 = vsub.f32 %v222, %v225
      %s229 = scalar_lea.vmem %s200, 24
      %v230 = vld [vmem:[%s229] sm:$0xff]
      %v231 = vld [vmem:[%s229 + $0x8] sm:$0xff]
      %v232 = vld [vmem:[%s229 + $0x10] sm:$0xf]
      %s233 = scalar_lea.vmem %s211, 24
      %v234 = vld [vmem:[%s233] sm:$0xff]
      %v235 = vld [vmem:[%s233 + $0x8] sm:$0xff]
      %v236 = vld [vmem:[%s233 + $0x10] sm:$0xf]
      %v237 = vsub.f32 %v230, %v234
      %v238 = vsub.f32 %v231, %v235
      %v239 = vsub.f32 %v232, %v236
      %v240 = vadd.f32 %v226, %v237
      %v241 = vadd.f32 %v227, %v238
      %v242 = vadd.f32 %v228, %v239
      %s243 = scalar_lea.vmem %s200, 48
      %v244 = vld [vmem:[%s243] sm:$0xff]
      %v245 = vld [vmem:[%s243 + $0x8] sm:$0xff]
      %v246 = vld [vmem:[%s243 + $0x10] sm:$0xf]
      %s247 = scalar_lea.vmem %s211, 48
      %v248 = vld [vmem:[%s247] sm:$0xff]
      %v249 = vld [vmem:[%s247 + $0x8] sm:$0xff]
      %v250 = vld [vmem:[%s247 + $0x10] sm:$0xf]
      %v251 = vsub.f32 %v244, %v248
      %v252 = vsub.f32 %v245, %v249
      %v253 = vsub.f32 %v246, %v250
      %v254 = vadd.f32 %v240, %v251
      %v255 = vadd.f32 %v241, %v252
      %v256 = vadd.f32 %v242, %v253
      %vm260 = vcmask 1046528
      %v261 = vrot.slane %v254, 1
      %v262 = vrot.slane %v255, 1
      %v263 = vsel %vm260, %v261, %v262
      %v264 = vrot.slane %v256, 1
      %v265 = vsel %vm260, %v262, %v264
      %v268 = vadd.f32 %v254, %v263
      %v269 = vadd.f32 %v255, %v265
      %vm270 = vcmask 1045504
      %v271 = vrot.slane %v254, 2
      %v272 = vrot.slane %v255, 2
      %v273 = vsel %vm270, %v271, %v272
      %v274 = vrot.slane %v256, 2
      %v275 = vsel %vm270, %v272, %v274
      %v278 = vadd.f32 %v268, %v273
      %v279 = vadd.f32 %v269, %v275
      %vm280 = vcmask 1044480
      %v281 = vrot.slane %v254, 3
      %v282 = vrot.slane %v255, 3
      %v283 = vsel %vm280, %v281, %v282
      %v284 = vrot.slane %v256, 3
      %v285 = vsel %vm280, %v282, %v284
      %v288 = vadd.f32 %v278, %v283
      %v289 = vadd.f32 %v279, %v285
      %vm290 = vcmask 1043456
      %v291 = vrot.slane %v254, 4
      %v292 = vrot.slane %v255, 4
      %v293 = vsel %vm290, %v291, %v292
      %v294 = vrot.slane %v256, 4
      %v295 = vsel %vm290, %v292, %v294
      %v298 = vadd.f32 %v288, %v293
      %v299 = vadd.f32 %v289, %v295
      %302 = vrot.lane.b32.xlu0 %v298, 127
      %v303 = vpop.permute.xlu0 %302
      %304 = vrot.lane.b32.xlu0 %v299, 127
      %v305 = vpop.permute.xlu0 %304
      %v308 = vadd.f32 %v298, %v303
      %v309 = vadd.f32 %v299, %v305
      %310 = vrot.lane.b32.xlu0 %v298, 126
      %v311 = vpop.permute.xlu0 %310
      %312 = vrot.lane.b32.xlu0 %v299, 126
      %v313 = vpop.permute.xlu0 %312
      %v316 = vadd.f32 %v308, %v311
      %v317 = vadd.f32 %v309, %v313
      %318 = vrot.lane.b32.xlu0 %v298, 125
      %v319 = vpop.permute.xlu0 %318
      %320 = vrot.lane.b32.xlu0 %v299, 125
      %v321 = vpop.permute.xlu0 %320
      %v324 = vadd.f32 %v316, %v319
      %v325 = vadd.f32 %v317, %v321
      %326 = vrot.lane.b32.xlu0 %v298, 124
      %v327 = vpop.permute.xlu0 %326
      %328 = vrot.lane.b32.xlu0 %v299, 124
      %v329 = vpop.permute.xlu0 %328
      %v332 = vadd.f32 %v324, %v327
      %v333 = vadd.f32 %v325, %v329
      %v334 = vand.u32 2147483647, %v332
      %v335 = vand.u32 2147483647, %v333
      %vm336 = vcmask 130048
      %v337 = vsel %vm336, %v334, 0.0
      %v338 = vsel %vm336, %v335, 0.0
      %v339 = vadd.f32 %v337, %v338
      %340 = vadd.xlane.f32.xlu0 %v339
      %v341 = vpop.xlane.xlu0 %340
      %v342 = vrot.slane %v341, 4
      %v343 = vadd.f32 %v341, %v342
      %v344 = vrot.slane %v343, 2
      %v345 = vadd.f32 %v343, %v344
      %v346 = vrot.slane %v345, 1
      %v347 = vadd.f32 %v345, %v346
      %s348 = vtos %v347
      %s349 = smul.f32 %s348, 0.013333334
      %v350 = vstv %s349
      %351 = vst [vmem:[%s219] sm:$0x1] %v350
      %p352 = scmp.lt.s32.totalorder %s17, 1
      %s353 = scalar_select %p352, %s17, 1
      %p354 = scmp.lt.s32.totalorder %s18, 1
      %s355 = scalar_select %p354, %s18, 1
      %s356 = smul.addr %s353, 2
      %s357 = sadd.s32 %s355, %s356
      %s358 = scalar_lea.vmem %s2, %s357
      // Predicated region
      $region29: #{mean_loss.1} parent=27 // pred_check
        %p359 = pneg %p101
      $region30: #{mean_loss.1} parent=27 // pred_check_branch
        %361 = sbr.rel (%p359) target = $region32
      $region31: #{mean_loss.1} parent=27 // pred_region
        _
      $region32: #{mean_loss.1} parent=27 // pred_fallthru
        _
    $region28: #{mean_loss.1} parent=5 // pred_fallthru
      _
    %p362 = scmp.le.s32.totalorder 2, %s8
    // Predicated region
    $region33: #{mean_loss.1} parent=5 // pred_check
      %p363 = pneg %p362
    $region34: #{mean_loss.1} parent=5 // pred_check_branch
      %365 = sbr.rel (%p363) target = $region36
    $region35: #{mean_loss.1} parent=5 // pred_region
      %s366 = ssub.s32 %s8, 2
      // Predicated region
      $region37: #{mean_loss.1} parent=35 // pred_check
        %p367 = pneg %p107
      $region38: #{mean_loss.1} parent=35 // pred_check_branch
        %369 = sbr.rel (%p367) target = $region40
      $region39: #{mean_loss.1} parent=35 // pred_region
        %p370 = scmp.lt.s32.totalorder %s19, 1
        %s371 = scalar_select %p370, %s19, 1
        %p372 = scmp.lt.s32.totalorder %s20, 1
        %s373 = scalar_select %p372, %s20, 1
        %s374 = smul.addr %s371, 2
        %s375 = sadd.s32 %s373, %s374
        %s376 = scalar_lea.vmem %s2, %s375
      $region40: #{mean_loss.1} parent=35 // pred_fallthru
        _
    $region36: #{mean_loss.1} parent=5 // pred_fallthru
      _
  $region6: #{mean_loss.1} parent=0 // loop_footer
    %s12 = sadd.s32 1, %s8
  $region7: #{mean_loss.1} parent=0 // loop_footer_branch
    %7 = sbr.rel target = $region3
  $region8: #{mean_loss.1} parent=0 // loop_exit
    _

</llo_original>
